<compile_context>
chip_gen: v5e
topology: v5e:2x2
jax: 0.10.0
libtpu: 0.0.40
codegen_flags: <defaults>
</compile_context>

<pallas_src>
import math

import numpy as np

import jax
import jax.numpy as jnp
from jax.experimental import pallas as pl
from jax.experimental.pallas import tpu as pltpu


_LANE_ALIGN = 256        # v6e/v7x MXU is 256x256 -> 256-lane vocab tiles
_TOK_GRANULE = 16        # bf16 sublane packing: 16 rows per packed tile
_NEG_BIG = -1e30         # padded-vocab bias sentinel (f32 only; never store in fp16)


def _round_up(n, m):
    return ((n + m - 1) // m) * m


def _vmem_capacity_bytes():
    cap = None
    try:
        cap = int(pltpu.get_tpu_info().vmem_capacity_bytes)
    except Exception:
        cap = None
    if not cap or cap <= 0:
        cap = 64 * 1024 * 1024          # conservative default (v7x per-core VMEM)
    return cap


# ---------------------------------------------------------------------------
# Kernels
# ---------------------------------------------------------------------------
def _fused_kernel(x_ref, wt_ref, b_ref, out_ref):
    """Single vocab tile: matmul + bias + full log-softmax in one pass.

    x_ref  : (tm, D)  bf16  block of flattened decoder states
    wt_ref : (D, Vp)  bf16  pre-transposed weight (vocab lane-dense, resident)
    b_ref  : (1, Vp)  f32   bias; padded vocab columns hold -1e30
    out_ref: (tm, Vp)       log_softmax over the (padded) vocab axis
    """
    logits = jnp.dot(x_ref[...], wt_ref[...],
                     preferred_element_type=jnp.float32)        # MXU, f32 accum
    logits = logits + b_ref[...]                                # f32 bias add
    m = jnp.max(logits, axis=-1, keepdims=True)
    shifted = logits - m
    sumexp = jnp.sum(jnp.exp(shifted), axis=-1, keepdims=True)
    out_ref[...] = (shifted - jnp.log(sumexp)).astype(out_ref.dtype)


def _tiled_kernel(x_ref, wt_ref, b_ref, logits_ref, lse_ref, m_sc, l_sc):
    """Vocab-tiled path with online logsumexp (flash-softmax style).

    Grid = (token tiles, vocab tiles); the vocab axis is the reduction
    ("arbitrary").  Each step writes the raw bias-added logits block; the last
    vocab step writes the per-row logsumexp.  Normalization happens in a fused
    elementwise epilogue outside the kernel.
    """
    j = pl.program_id(1)

    @pl.when(j == 0)
    def _():
        m_sc[...] = jnp.full(m_sc.shape, -jnp.inf, dtype=m_sc.dtype)
        l_sc[...] = jnp.zeros(l_sc.shape, dtype=l_sc.dtype)

    block = jnp.dot(x_ref[...], wt_ref[...],
                    preferred_element_type=jnp.float32) + b_ref[...]
    logits_ref[...] = block.astype(logits_ref.dtype)

    m_prev = m_sc[...]
    m_new = jnp.maximum(m_prev, jnp.max(block, axis=-1, keepdims=True))
    l_sc[...] = (l_sc[...] * jnp.exp(m_prev - m_new) +
                 jnp.sum(jnp.exp(block - m_new), axis=-1, keepdims=True))
    m_sc[...] = m_new

    @pl.when(j == pl.num_programs(1) - 1)
    def _():
        lse_ref[...] = m_sc[...] + jnp.log(l_sc[...])


# ---------------------------------------------------------------------------
# pallas_call builders
# ---------------------------------------------------------------------------
def _call_fused(x_flat, wt, b2, *, tm, out_dtype, vmem_limit, single_buffer):
    n_pad, D = x_flat.shape
    Vp = wt.shape[1]
    if single_buffer:
        # Resident operands (constant index_map) don't need double buffers.
        w_spec = pl.BlockSpec((D, Vp), lambda i: (0, 0), pipeline_mode=pl.Buffered(1))
        b_spec = pl.BlockSpec((1, Vp), lambda i: (0, 0), pipeline_mode=pl.Buffered(1))
    else:
        w_spec = pl.BlockSpec((D, Vp), lambda i: (0, 0))
        b_spec = pl.BlockSpec((1, Vp), lambda i: (0, 0))
    cost = pl.CostEstimate(
        flops=2 * n_pad * D * Vp,
        transcendentals=n_pad * Vp + n_pad,
        bytes_accessed=(n_pad * D * 2 + D * Vp * 2 + Vp * 4
                        + n_pad * Vp * np.dtype(out_dtype).itemsize),
    )
    return pl.pallas_call(
        _fused_kernel,
        out_shape=jax.ShapeDtypeStruct((n_pad, Vp), out_dtype),
        grid_spec=pltpu.PrefetchScalarGridSpec(
            num_scalar_prefetch=0,
            grid=(n_pad // tm,),
            in_specs=[pl.BlockSpec((tm, D), lambda i: (i, 0)),   # token block of x
                      w_spec,                                     # resident weight
                      b_spec],                                    # resident bias
            out_specs=pl.BlockSpec((tm, Vp), lambda i: (i, 0)),
        ),
        compiler_params=pltpu.CompilerParams(
            dimension_semantics=("parallel",),
            vmem_limit_bytes=vmem_limit),
        cost_estimate=cost,
    )(x_flat, wt, b2)


def _call_tiled(x_flat, wt, b2, *, tm, tv, logits_dtype, vmem_limit):
    n_pad, D = x_flat.shape
    Vp = wt.shape[1]
    n_ttiles = n_pad // tm
    n_vtiles = Vp // tv
    cost = pl.CostEstimate(
        flops=2 * n_pad * D * Vp,
        transcendentals=n_pad * Vp + n_pad,
        bytes_accessed=(n_pad * D * 2 + n_ttiles * (D * Vp * 2 + Vp * 4)
                        + n_pad * Vp * np.dtype(logits_dtype).itemsize
                        + n_pad * 4),
    )
    return pl.pallas_call(
        _tiled_kernel,
        out_shape=(jax.ShapeDtypeStruct((n_pad, Vp), logits_dtype),   # raw logits
                   jax.ShapeDtypeStruct((n_pad, 1), jnp.float32)),    # logsumexp
        grid_spec=pltpu.PrefetchScalarGridSpec(
            num_scalar_prefetch=0,
            grid=(n_ttiles, n_vtiles),
            in_specs=[
                pl.BlockSpec((tm, D), lambda i, j: (i, 0)),   # x block (resident over j)
                pl.BlockSpec((D, tv), lambda i, j: (0, j)),   # weight vocab block
                pl.BlockSpec((1, tv), lambda i, j: (0, j)),   # bias vocab block
            ],
            out_specs=[
                pl.BlockSpec((tm, tv), lambda i, j: (i, j)),  # lane-dense logits block
                pl.BlockSpec((tm, 1), lambda i, j: (i, 0)),   # per-row lse (resident over j)
            ],
            scratch_shapes=[pltpu.VMEM((tm, 1), jnp.float32),   # running max
                            pltpu.VMEM((tm, 1), jnp.float32)],  # running sum-exp
        ),
        compiler_params=pltpu.CompilerParams(
            dimension_semantics=("parallel", "arbitrary"),
            vmem_limit_bytes=vmem_limit),
        cost_estimate=cost,
    )(x_flat, wt, b2)


# ---------------------------------------------------------------------------
# Parameter preparation (hoisted out of the hot path) + forward
# ---------------------------------------------------------------------------
def prepare_generator_params(weight, bias):
    """One-time prep: transpose W to (D, Vp) so the kernel matmul output is
    lane-dense over vocab, pad vocab to a multiple of 256 lanes, cast the matmul
    operand to bf16 (MXU-native; accumulation stays f32 in-kernel), and pad the
    f32 bias with -1e30 so padded columns never affect the softmax."""
    V, D = weight.shape
    Vp = _round_up(V, _LANE_ALIGN)
    wt = jnp.pad(jnp.asarray(weight, jnp.float32).T,
                 ((0, 0), (0, Vp - V))).astype(jnp.bfloat16)
    b2 = jnp.pad(jnp.asarray(bias, jnp.float32), (0, Vp - V),
                 constant_values=_NEG_BIG).reshape(1, Vp)
    return {"wt": wt, "b2": b2, "V": V}


def generator_forward_prepared(x, params, *, token_block=256, vocab_tile=2048,
                               out_dtype=jnp.float32):
    """log_softmax(x @ W.T + b, axis=-1) using pre-prepared parameters."""
    wt, b2, V = params["wt"], params["b2"], params["V"]
    D, Vp = wt.shape
    B, S, Dx = x.shape
    assert Dx == D, "decoder_dim mismatch between x and weight"
    n_tok = B * S

    # Token tiling: granule 16 (bf16 sublane packing), minimal padding, and
    # >= 2 grid steps when possible so v7x's two TensorCores both get work.
    n_ttiles = max(pl.cdiv(n_tok, token_block),
                   2 if n_tok >= 2 * _TOK_GRANULE else 1)
    tm = _TOK_GRANULE * pl.cdiv(n_tok, _TOK_GRANULE * n_ttiles)
    n_ttiles = pl.cdiv(n_tok, tm)
    n_pad = int(tm) * int(n_ttiles)
    tm = int(tm)

    x_flat = x.reshape(n_tok, D).astype(jnp.bfloat16)
    if n_pad != n_tok:
        x_flat = jnp.pad(x_flat, ((0, n_pad - n_tok), (0, 0)))

    # VMEM budget / scoped limit (default scoped limit is far below physical).
    vmem_cap = _vmem_capacity_bytes()
    vmem_limit = int(vmem_cap * 0.85)
    budget = int(vmem_cap * 0.60)

    # Vocab tile: largest multiple of 256 dividing Vp, capped by the request and
    # by the VMEM budget (weight block + logits block + softmax temporaries).
    per_lane = 2 * D * 2 + 5 * tm * 4 + 2 * 4
    cap = min(int(vocab_tile), budget // per_lane, Vp)
    cap = max(_LANE_ALIGN, (cap // _LANE_ALIGN) * _LANE_ALIGN)
    tv = _LANE_ALIGN
    c = cap
    while c >= _LANE_ALIGN:
        if Vp % c == 0:
            tv = c
            break
        c -= _LANE_ALIGN
    n_vtiles = Vp // tv

    # Path selection: fully fused when a single vocab tile fits comfortably.
    fused_bytes = (2 * tm * D * 2          # x block (double-buffered, bf16)
                   + 2 * D * Vp * 2        # weight (counted double-buffered for safety)
                   + 2 * Vp * 4            # bias
                   + 5 * tm * Vp * 4)      # out block (x2) + softmax temporaries (~x3)
    if n_vtiles == 1 and fused_bytes <= budget:
        try:
            out_flat = _call_fused(x_flat, wt, b2, tm=tm, out_dtype=out_dtype,
                                   vmem_limit=vmem_limit, single_buffer=True)
        except Exception:
            # pl.Buffered(1) not supported by this JAX version: fall back to the
            # default double-buffered resident weight/bias.
            out_flat = _call_fused(x_flat, wt, b2, tm=tm, out_dtype=out_dtype,
                                   vmem_limit=vmem_limit, single_buffer=False)
        if n_pad == n_tok and Vp == V:
            return out_flat.reshape(B, S, V)            # no slice copy needed
        return out_flat[:n_tok, :V].reshape(B, S, V)

    # Vocab-tiled path: raw logits + logsumexp, then a cheap epilogue.  Under
    # jit, XLA fuses the padding slice, the subtraction and the cast into one
    # elementwise pass over the output.
    logits, lse = _call_tiled(x_flat, wt, b2, tm=tm, tv=tv,
                              logits_dtype=jnp.float32, vmem_limit=vmem_limit)
    # TODO(synk): for HBM-writeback-bound cases (large V on v5e/v6e) fuse the
    # downstream NLL gather into the tiled kernel or emit bf16 log-probs so the
    # full (n_tok, V) f32 matrix doesn't round-trip HBM twice.
    out = (logits[:n_tok, :V] - lse[:n_tok]).astype(out_dtype)
    return out.reshape(B, S, V)


def generator_forward(x, weight, bias, **kwargs):
    """Convenience wrapper (prefer caching prepare_generator_params once)."""
    return generator_forward_prepared(x, prepare_generator_params(weight, bias),
                                      **kwargs)


# ---------------------------------------------------------------------------
# Demo / correctness check
# ---------------------------------------------------------------------------
if __name__ == "__main__":
    def make_case(key, B, S, decoder_dim, vocab_len):
        kx, kw, kb = jax.random.split(key, 3)
        x = jax.random.normal(kx, (B, S, decoder_dim), dtype=jnp.float32)
        # nn.Linear default init: U(-k, k) with k = 1/sqrt(in_features).
        lim = 1.0 / math.sqrt(decoder_dim)
        w = jax.random.uniform(kw, (vocab_len, decoder_dim), jnp.float32, -lim, lim)
        b = jax.random.uniform(kb, (vocab_len,), jnp.float32, -lim, lim)
        return x, w, b

    def check(name, x, w, b, out):
        B, S, _ = x.shape
        V = w.shape[0]
        assert out.shape == (B, S, V), (name, out.shape)
        # Reference built from the same bf16-rounded matmul operands the kernel
        # feeds the MXU (accumulation stays f32) -> tight tolerance.
        xb = x.astype(jnp.bfloat16).astype(jnp.float32)
        wb = w.astype(jnp.bfloat16).astype(jnp.float32)
        ref = jax.nn.log_softmax(
            jnp.einsum("bsd,vd->bsv", xb, wb,
                       precision=jax.lax.Precision.HIGHEST) + b, axis=-1)
        err = float(jnp.max(jnp.abs(out - ref)))
        assert err < 2e-3, (name, "bf16-operand reference mismatch", err)
        # Sanity vs the pure-f32 PyTorch semantics (loose: bf16 input rounding).
        ref32 = jax.nn.log_softmax(
            jnp.einsum("bsd,vd->bsv", x, w,
                       precision=jax.lax.Precision.HIGHEST) + b, axis=-1)
        err32 = float(jnp.max(jnp.abs(out - ref32)))
        assert err32 < 1e-1, (name, "f32 reference mismatch", err32)

    key = jax.random.PRNGKey(0)
    k1, k2 = jax.random.split(key)

    # Case 1: small vocab -> single vocab tile -> fully fused path.
    # (2 token tiles exercise the "parallel" axis; vocab padded 200 -> 256.)
    x1, w1, bias1 = make_case(k1, 2, 16, 32, 200)
    params1 = prepare_generator_params(w1, bias1)        # hoisted one-time prep
    out1 = jax.block_until_ready(generator_forward_prepared(x1, params1))
    check("fused", x1, w1, bias1, out1)

    # Case 2: force the vocab-tiled online-logsumexp path (vocab_tile=256 ->
    # 2 vocab tiles over Vp=512) with both token and vocab padding.
    x2, w2, bias2 = make_case(k2, 2, 9, 32, 500)
    params2 = prepare_generator_params(w2, bias2)
    out2 = jax.block_until_ready(
        generator_forward_prepared(x2, params2, vocab_tile=256))
    check("tiled", x2, w2, bias2, out2)

    print("KERNEL_OK")
</pallas_src>

<mosaic_0001>
module attributes {stable_mosaic.version = 11 : i64} {
  func.func @_fused_kernel(%arg0: i32, %arg1: memref<16x32xbf16, #tpu.memory_space<vmem>>, %arg2: memref<32x256xbf16, #tpu.memory_space<vmem>>, %arg3: memref<1x256xf32, #tpu.memory_space<vmem>>, %arg4: memref<16x256xf32, #tpu.memory_space<vmem>>) attributes {dimension_semantics = [#tpu.dimension_semantics<parallel>], iteration_bounds = array<i64: 2>, scalar_prefetch = 0 : i64, scratch_operands = 0 : i64, tpu.core_type = #tpu.core_type<tc>, window_params = [{transform_indices = @transform_0, window_bounds = array<i64: 16, 32>}, {pipeline_mode = #tpu.pipeline_mode<synchronous>, transform_indices = @transform_1, window_bounds = array<i64: 32, 256>}, {pipeline_mode = #tpu.pipeline_mode<synchronous>, transform_indices = @transform_2, window_bounds = array<i64: 1, 256>}, {transform_indices = @transform_3, window_bounds = array<i64: 16, 256>}]} {
    %c0 = arith.constant 0 : index
    %c0_0 = arith.constant 0 : index
    %0 = vector.load %arg1[%c0, %c0_0] : memref<16x32xbf16, #tpu.memory_space<vmem>>, vector<16x32xbf16>
    %c0_1 = arith.constant 0 : index
    %c0_2 = arith.constant 0 : index
    %1 = vector.load %arg2[%c0_1, %c0_2] : memref<32x256xbf16, #tpu.memory_space<vmem>>, vector<32x256xbf16>
    %cst = arith.constant dense<0.000000e+00> : vector<16x256xf32>
    %2 = tpu.matmul %0, %1, %cst {dimension_numbers = #tpu.dot_dimension_numbers<[1], [0], [0], [1], [0, 0, 1, 1], [], []>} : vector<16x32xbf16>, vector<32x256xbf16>, vector<16x256xf32> -> vector<16x256xf32>
    %c0_3 = arith.constant 0 : index
    %c0_4 = arith.constant 0 : index
    %3 = vector.load %arg3[%c0_3, %c0_4] : memref<1x256xf32, #tpu.memory_space<vmem>>, vector<1x256xf32>
    %4 = vector.broadcast %3 : vector<1x256xf32> to vector<16x256xf32>
    %5 = arith.addf %2, %4 : vector<16x256xf32>
    %cst_5 = arith.constant dense<0xFF800000> : vector<16xf32>
    %6 = vector.multi_reduction <maximumf>, %5, %cst_5 [1] : vector<16x256xf32> to vector<16xf32>
    %7 = vector.shape_cast %6 : vector<16xf32> to vector<16x1xf32>
    %8 = vector.broadcast %7 : vector<16x1xf32> to vector<16x256xf32>
    %9 = arith.subf %5, %8 : vector<16x256xf32>
    %10 = math.exp %9 : vector<16x256xf32>
    %cst_6 = arith.constant dense<0.000000e+00> : vector<16xf32>
    %11 = vector.multi_reduction <add>, %10, %cst_6 [1] : vector<16x256xf32> to vector<16xf32>
    %12 = vector.shape_cast %11 : vector<16xf32> to vector<16x1xf32>
    %13 = math.log %12 : vector<16x1xf32>
    %14 = vector.broadcast %13 : vector<16x1xf32> to vector<16x256xf32>
    %15 = arith.subf %9, %14 : vector<16x256xf32>
    %c0_7 = arith.constant 0 : index
    %c0_8 = arith.constant 0 : index
    %16 = vector.load %arg4[%c0_7, %c0_8] : memref<16x256xf32, #tpu.memory_space<vmem>>, vector<16x256xf32>
    tpu.vector_store %arg4[%c0_7, %c0_8], %15 {strides = array<i32>} : memref<16x256xf32, #tpu.memory_space<vmem>>, vector<16x256xf32>,
    return
  }
  func.func @transform_0(%arg0: i32) -> (i32, i32) {
    %c0_i32 = arith.constant 0 : i32
    %c0_i32_0 = arith.constant 0 : i32
    return %arg0, %c0_i32 : i32, i32
  }
  func.func @transform_1(%arg0: i32) -> (i32, i32) {
    %c0_i32 = arith.constant 0 : i32
    %c0_i32_0 = arith.constant 0 : i32
    %c0_i32_1 = arith.constant 0 : i32
    return %c0_i32, %c0_i32_0 : i32, i32
  }
  func.func @transform_2(%arg0: i32) -> (i32, i32) {
    %c0_i32 = arith.constant 0 : i32
    %c0_i32_0 = arith.constant 0 : i32
    %c0_i32_1 = arith.constant 0 : i32
    return %c0_i32, %c0_i32_0 : i32, i32
  }
  func.func @transform_3(%arg0: i32) -> (i32, i32) {
    %c0_i32 = arith.constant 0 : i32
    %c0_i32_0 = arith.constant 0 : i32
    return %arg0, %c0_i32 : i32, i32
  }
}

module attributes {stable_mosaic.version = 11 : i64} {
  func.func @_fused_kernel(%arg0: i32, %arg1: memref<16x32xbf16, #tpu.memory_space<vmem>>, %arg2: memref<32x256xbf16, #tpu.memory_space<vmem>>, %arg3: memref<1x256xf32, #tpu.memory_space<vmem>>, %arg4: memref<16x256xf32, #tpu.memory_space<vmem>>) attributes {dimension_semantics = [#tpu.dimension_semantics<parallel>], iteration_bounds = array<i64: 2>, scalar_prefetch = 0 : i64, scratch_operands = 0 : i64, tpu.core_type = #tpu.core_type<tc>, window_params = [{transform_indices = @transform_0, window_bounds = array<i64: 16, 32>}, {pipeline_mode = #tpu.pipeline_mode<synchronous>, transform_indices = @transform_1, window_bounds = array<i64: 32, 256>}, {pipeline_mode = #tpu.pipeline_mode<synchronous>, transform_indices = @transform_2, window_bounds = array<i64: 1, 256>}, {transform_indices = @transform_3, window_bounds = array<i64: 16, 256>}]} {
    %c0 = arith.constant 0 : index
    %c0_0 = arith.constant 0 : index
    %0 = vector.load %arg1[%c0, %c0_0] : memref<16x32xbf16, #tpu.memory_space<vmem>>, vector<16x32xbf16>
    %c0_1 = arith.constant 0 : index
    %c0_2 = arith.constant 0 : index
    %1 = vector.load %arg2[%c0_1, %c0_2] : memref<32x256xbf16, #tpu.memory_space<vmem>>, vector<32x256xbf16>
    %cst = arith.constant dense<0.000000e+00> : vector<16x256xf32>
    %2 = tpu.matmul %0, %1, %cst {dimension_numbers = #tpu.dot_dimension_numbers<[1], [0], [0], [1], [0, 0, 1, 1], [], []>} : vector<16x32xbf16>, vector<32x256xbf16>, vector<16x256xf32> -> vector<16x256xf32>
    %c0_3 = arith.constant 0 : index
    %c0_4 = arith.constant 0 : index
    %3 = vector.load %arg3[%c0_3, %c0_4] : memref<1x256xf32, #tpu.memory_space<vmem>>, vector<1x256xf32>
    %4 = vector.broadcast %3 : vector<1x256xf32> to vector<16x256xf32>
    %5 = arith.addf %2, %4 : vector<16x256xf32>
    %cst_5 = arith.constant dense<0xFF800000> : vector<16xf32>
    %6 = vector.multi_reduction <maximumf>, %5, %cst_5 [1] : vector<16x256xf32> to vector<16xf32>
    %7 = vector.shape_cast %6 : vector<16xf32> to vector<16x1xf32>
    %8 = vector.broadcast %7 : vector<16x1xf32> to vector<16x256xf32>
    %9 = arith.subf %5, %8 : vector<16x256xf32>
    %10 = math.exp %9 : vector<16x256xf32>
    %cst_6 = arith.constant dense<0.000000e+00> : vector<16xf32>
    %11 = vector.multi_reduction <add>, %10, %cst_6 [1] : vector<16x256xf32> to vector<16xf32>
    %12 = vector.shape_cast %11 : vector<16xf32> to vector<16x1xf32>
    %13 = math.log %12 : vector<16x1xf32>
    %14 = vector.broadcast %13 : vector<16x1xf32> to vector<16x256xf32>
    %15 = arith.subf %9, %14 : vector<16x256xf32>
    %c0_7 = arith.constant 0 : index
    %c0_8 = arith.constant 0 : index
    %16 = vector.load %arg4[%c0_7, %c0_8] : memref<16x256xf32, #tpu.memory_space<vmem>>, vector<16x256xf32>
    tpu.vector_store %arg4[%c0_7, %c0_8], %15 {strides = array<i32>} : memref<16x256xf32, #tpu.memory_space<vmem>>, vector<16x256xf32>,
    return
  }
  func.func @transform_0(%arg0: i32) -> (i32, i32) {
    %c0_i32 = arith.constant 0 : i32
    %c0_i32_0 = arith.constant 0 : i32
    return %arg0, %c0_i32 : i32, i32
  }
  func.func @transform_1(%arg0: i32) -> (i32, i32) {
    %c0_i32 = arith.constant 0 : i32
    %c0_i32_0 = arith.constant 0 : i32
    %c0_i32_1 = arith.constant 0 : i32
    return %c0_i32, %c0_i32_0 : i32, i32
  }
  func.func @transform_2(%arg0: i32) -> (i32, i32) {
    %c0_i32 = arith.constant 0 : i32
    %c0_i32_0 = arith.constant 0 : i32
    %c0_i32_1 = arith.constant 0 : i32
    return %c0_i32, %c0_i32_0 : i32, i32
  }
  func.func @transform_3(%arg0: i32) -> (i32, i32) {
    %c0_i32 = arith.constant 0 : i32
    %c0_i32_0 = arith.constant 0 : i32
    return %arg0, %c0_i32 : i32, i32
  }
}

</mosaic_0001>

<llo_original>
// kernel: tpu_custom_call.1
$region0: #{tpu_custom_call.1}
  #allocation0 [shape = 'u32[]', space=smem, size = 0x4, offset = 0x4, fixed_abs, tag = 'smem constant byte address 0x4 - core index']
  #allocation1 [shape = 'u32[72,128]{1,0:T(1,128)}', space=vmem, size = 0x9000, scoped, tag = 'internal scratch']
  %s0 = inlined_call_operand.hbm [shape: bf16[32,32], index: 0, kind: input, shape index: {}]
  %s1 = inlined_call_operand.hbm [shape: bf16[32,256], index: 1, kind: input, shape index: {}]
  %s2 = inlined_call_operand.hbm [shape: f32[1,256], index: 2, kind: input, shape index: {}]
  %s3 = inlined_call_operand.hbm [shape: f32[32,256], index: 3, kind: output, shape index: {}]
  %s4 = sld [smem:[#allocation0]]
  $region57: #{tpu_custom_call.1} parent=0
    _
  %s6 = ssub.s32 1, %s4
  %s7 = scalar_select 0, %s6, %s4
  $region1: #{tpu_custom_call.1} parent=0
    #allocation2 [shape = 'u8[8192]{0}', space=vmem, size = 0x2000, scoped, tag = 'input window, operand 0']
    #allocation3 [shape = 's32[2]{0}', space=sflag, size = 0x8, scoped, tag = 'scoped memory for tpu_custom_call.1']
    #allocation4 [shape = 's32[2]{0}', space=sflag, size = 0x8, scoped, tag = 'scoped memory for tpu_custom_call.1']
    #allocation5 [shape = 'u8[16384]{0}', space=vmem, size = 0x4000, scoped, tag = 'input window, operand 1, single buffered']
    #allocation6 [shape = 's32[1]{0}', space=sflag, size = 0x4, scoped, tag = 'scoped memory for tpu_custom_call.1']
    #allocation7 [shape = 'u8[1024]{0}', space=vmem, size = 0x400, scoped, tag = 'input window, operand 2, single buffered']
    #allocation8 [shape = 'u8[32768]{0}', space=vmem, size = 0x8000, scoped, tag = 'output window, operand 0']
    %8 = vsyncpa [#allocation3], 0
    %s9 = scalar_lea.sflag [#allocation3], 1
    %10 = vsyncpa %s9, 0
    %11 = vsyncpa [#allocation6], 0
    %12 = vsyncpa [#allocation4], 0
    %s13 = scalar_lea.sflag [#allocation4], 1
    %14 = vsyncpa %s13, 0
    loop: start=0, step=1, limit=4
    $region2: #{tpu_custom_call.1} parent=1 // loop_pre_header
      _
    $region3: #{tpu_custom_call.1} parent=1 // loop_header
      %s16 = sphi 0, %s20
      %p17 = scmp.ge.s32.totalorder %s16, 4
      %s26 = sphi 0, %s28
      %s29 = sphi 0, %s26
      %s30 = sphi 0, %s29
      %s46 = sphi 0, %s30
      %s50 = sphi 0, %s50
      %s52 = sphi 0, %s50
      %s53 = sphi 0, %s52
      %s67 = sphi 0, %s53
      %s71 = sphi 0, %s71
      %s73 = sphi 0, %s71
      %s74 = sphi 0, %s73
      %s88 = sphi 0, %s74
      %s94 = sphi 0, %s96
      %s97 = sphi 0, %s94
      %s98 = sphi 0, %s97
      %s114 = sphi 0, %s98
    $region4: #{tpu_custom_call.1} parent=1 // loop_header_branch
      %19 = sbr.rel (%p17) target = $region8
    $region5: #{tpu_custom_call.1} parent=1 // loop_body
      %s21 = ssub.s32 %s16, 1
      %s22 = ssub.s32 %s16, 2
      %s23 = sadd.s32 %s16, 1
      %s24 = ssub.s32 %s16, %s23
      %p25 = scmp.eq.s32.totalorder %s24, 0
      %s27 = sadd.s32 %s26, 1
      %s28 = scalar_select %p25, %s26, %s27
      %p31 = pneg %p25
      %p32 = scmp.eq.s32.totalorder %s16, 1
      %p33 = por %p31, %p32
      %p34 = scmp.ne.s32.totalorder %s26, %s29
      %p35 = scmp.eq.s32.totalorder %s16, 0
      %p36 = por %p34, %p35
      %p37 = scmp.ne.s32.totalorder %s26, %s29
      %p38 = scmp.eq.s32.totalorder %s21, 1
      %p39 = por %p37, %p38
      %p40 = scmp.ne.s32.totalorder %s29, %s30
      %p41 = scmp.eq.s32.totalorder %s21, 0
      %p42 = por %p40, %p41
      %p43 = scmp.ne.s32.totalorder %s29, %s30
      %p44 = scmp.eq.s32.totalorder %s22, 1
      %p45 = por %p43, %p44
      %p47 = scmp.ne.s32.totalorder %s30, %s46
      %p48 = scmp.eq.s32.totalorder %s22, 0
      %p49 = por %p47, %p48
      %s51 = sadd.s32 %s50, 1
      %p54 = scmp.eq.s32.totalorder %s16, 1
      %p55 = scmp.ne.s32.totalorder %s50, %s52
      %p56 = scmp.eq.s32.totalorder %s16, 0
      %p57 = por %p55, %p56
      %p58 = scmp.ne.s32.totalorder %s50, %s52
      %p59 = scmp.eq.s32.totalorder %s21, 1
      %p60 = por %p58, %p59
      %p61 = scmp.ne.s32.totalorder %s52, %s53
      %p62 = scmp.eq.s32.totalorder %s21, 0
      %p63 = por %p61, %p62
      %p64 = scmp.ne.s32.totalorder %s52, %s53
      %p65 = scmp.eq.s32.totalorder %s22, 1
      %p66 = por %p64, %p65
      %p68 = scmp.ne.s32.totalorder %s53, %s67
      %p69 = scmp.eq.s32.totalorder %s22, 0
      %p70 = por %p68, %p69
      %s72 = sadd.s32 %s71, 1
      %p75 = scmp.eq.s32.totalorder %s16, 1
      %p76 = scmp.ne.s32.totalorder %s71, %s73
      %p77 = scmp.eq.s32.totalorder %s16, 0
      %p78 = por %p76, %p77
      %p79 = scmp.ne.s32.totalorder %s71, %s73
      %p80 = scmp.eq.s32.totalorder %s21, 1
      %p81 = por %p79, %p80
      %p82 = scmp.ne.s32.totalorder %s73, %s74
      %p83 = scmp.eq.s32.totalorder %s21, 0
      %p84 = por %p82, %p83
      %p85 = scmp.ne.s32.totalorder %s73, %s74
      %p86 = scmp.eq.s32.totalorder %s22, 1
      %p87 = por %p85, %p86
      %p89 = scmp.ne.s32.totalorder %s74, %s88
      %p90 = scmp.eq.s32.totalorder %s22, 0
      %p91 = por %p89, %p90
      %s92 = ssub.s32 %s16, %s23
      %p93 = scmp.eq.s32.totalorder %s92, 0
      %s95 = sadd.s32 %s94, 1
      %s96 = scalar_select %p93, %s94, %s95
      %p99 = pneg %p93
      %p100 = scmp.eq.s32.totalorder %s16, 1
      %p101 = por %p99, %p100
      %p102 = scmp.ne.s32.totalorder %s94, %s97
      %p103 = scmp.eq.s32.totalorder %s16, 0
      %p104 = por %p102, %p103
      %p105 = scmp.ne.s32.totalorder %s94, %s97
      %p106 = scmp.eq.s32.totalorder %s21, 1
      %p107 = por %p105, %p106
      %p108 = scmp.ne.s32.totalorder %s97, %s98
      %p109 = scmp.eq.s32.totalorder %s21, 0
      %p110 = por %p108, %p109
      %p111 = scmp.ne.s32.totalorder %s97, %s98
      %p112 = scmp.eq.s32.totalorder %s22, 1
      %p113 = por %p111, %p112
      %p115 = scmp.ne.s32.totalorder %s98, %s114
      %p116 = scmp.eq.s32.totalorder %s22, 0
      %p117 = por %p115, %p116
      %p118 = scmp.le.s32.totalorder 1, %s16
      %p119 = scmp.lt.s32.totalorder %s16, 3
      %p120 = pnand %p118, %p119
      %p121 = pneg %p120
      // Predicated region
      $region9: #{tpu_custom_call.1} parent=5 // pred_check
        _
      $region10: #{tpu_custom_call.1} parent=5 // pred_check_branch
        %123 = sbr.rel (%p120) target = $region12
      $region11: #{tpu_custom_call.1} parent=5 // pred_region
        %s124 = ssub.s32 %s16, 1
        // Predicated region
        $region13: #{tpu_custom_call.1} parent=11 // pred_check
          %p125 = pneg %p63
        $region14: #{tpu_custom_call.1} parent=11 // pred_check_branch
          %127 = sbr.rel (%p125) target = $region16
        $region15: #{tpu_custom_call.1} parent=11 // pred_region
          %129 = vsyncadd [#allocation6], 0
          %s130 = sshll.u32 %s1, 4
          %s131 = int_to_ptr.hbm [resolvable:$true] %s130
          %s132 = sshll.u32 [#allocation5], 4
          %s133 = int_to_ptr.vmem [resolvable:$true] %s132
          %138 = dma.hbm_to_vmem [thread:$0]  %s131, 512, %s133, [#allocation6], 128, 128, 8
        $region16: #{tpu_custom_call.1} parent=11 // pred_fallthru
          _
        // Predicated region
        $region17: #{tpu_custom_call.1} parent=11 // pred_check
          %p139 = pneg %p84
        $region18: #{tpu_custom_call.1} parent=11 // pred_check_branch
          %141 = sbr.rel (%p139) target = $region20
        $region19: #{tpu_custom_call.1} parent=11 // pred_region
          %143 = vsyncadd [#allocation6], 0
          %s145 = sshll.u32 %s2, 4
          %s146 = int_to_ptr.hbm [resolvable:$true] %s145
          %s147 = sshll.u32 [#allocation7], 4
          %s148 = int_to_ptr.vmem [resolvable:$true] %s147
          %150 = dma.hbm_to_vmem [thread:$0]  %s146, 32, %s148, [#allocation6]
        $region20: #{tpu_custom_call.1} parent=11 // pred_fallthru
          _
      $region12: #{tpu_custom_call.1} parent=5 // pred_fallthru
        _
      %p151 = scmp.lt.s32.totalorder %s16, 2
      // Predicated region
      $region21: #{tpu_custom_call.1} parent=5 // pred_check
        %p152 = pneg %p151
      $region22: #{tpu_custom_call.1} parent=5 // pred_check_branch
        %154 = sbr.rel (%p152) target = $region24
      $region23: #{tpu_custom_call.1} parent=5 // pred_region
        // Predicated region
        $region25: #{tpu_custom_call.1} parent=23 // pred_check
          %p155 = pneg %p36
        $region26: #{tpu_custom_call.1} parent=23 // pred_check_branch
          %157 = sbr.rel (%p155) target = $region28
        $region27: #{tpu_custom_call.1} parent=23 // pred_region
          %s158 = sand.u32 %s26, 1
          %s159 = scalar_lea.sflag [#allocation3], %s158
          %s160 = sand.u32 %s26, 1
          %s161 = smul.addr %s160, 8
          %s162 = scalar_lea.vmem [#allocation2], %s161
          %s163 = smul.u32 2, %s16
          %165 = vsyncadd %s159, 0
          %s166 = smul.addr %s163, 4
          %s167 = scalar_lea.hbm %s0, %s166
          %s168 = sshll.u32 %s167, 4
          %s169 = int_to_ptr.hbm [resolvable:$true] %s168
          %s170 = sshll.u32 %s162, 4
          %s171 = int_to_ptr.vmem [resolvable:$true] %s170
          %176 = dma.hbm_to_vmem [thread:$0]  %s169, 128, %s171, %s159, 64, 64, 4
        $region28: #{tpu_custom_call.1} parent=23 // pred_fallthru
          _
      $region24: #{tpu_custom_call.1} parent=5 // pred_fallthru
        _
      %p177 = scmp.le.s32.totalorder 1, %s16
      %p178 = scmp.lt.s32.totalorder %s16, 3
      %p179 = pnand %p177, %p178
      %p180 = pneg %p179
      // Predicated region
      $region29: #{tpu_custom_call.1} parent=5 // pred_check
        _
      $region30: #{tpu_custom_call.1} parent=5 // pred_check_branch
        %182 = sbr.rel (%p179) target = $region32
      $region31: #{tpu_custom_call.1} parent=5 // pred_region
        %s183 = ssub.s32 %s16, 1
        %s184 = sand.u32 %s29, 1
        %s185 = scalar_lea.sflag [#allocation3], %s184
        %s186 = sand.u32 %s29, 1
        %s187 = smul.addr %s186, 8
        %s188 = scalar_lea.vmem [#allocation2], %s187
        // Predicated region
        $region33: #{tpu_custom_call.1} parent=31 // pred_check
          %p189 = pneg %p42
        $region34: #{tpu_custom_call.1} parent=31 // pred_check_branch
          %191 = sbr.rel (%p189) target = $region36
        $region35: #{tpu_custom_call.1} parent=31 // pred_region
          %193 = dma.done %s185, 128
        $region36: #{tpu_custom_call.1} parent=31 // pred_fallthru
          _
        // Predicated region
        $region37: #{tpu_custom_call.1} parent=31 // pred_check
          %p194 = pneg %p63
        $region38: #{tpu_custom_call.1} parent=31 // pred_check_branch
          %196 = sbr.rel (%p194) target = $region40
        $region39: #{tpu_custom_call.1} parent=31 // pred_region
          %198 = dma.done [#allocation6], 512
        $region40: #{tpu_custom_call.1} parent=31 // pred_fallthru
          _
        // Predicated region
        $region41: #{tpu_custom_call.1} parent=31 // pred_check
          %p199 = pneg %p84
        $region42: #{tpu_custom_call.1} parent=31 // pred_check_branch
          %201 = sbr.rel (%p199) target = $region44
        $region43: #{tpu_custom_call.1} parent=31 // pred_region
          %203 = dma.done [#allocation6], 32
        $region44: #{tpu_custom_call.1} parent=31 // pred_fallthru
          _
        %s204 = sand.u32 %s29, 1
        %s205 = scalar_lea.sflag [#allocation3], %s204
        %s206 = sand.u32 %s29, 1
        %s207 = smul.addr %s206, 8
        %s208 = scalar_lea.vmem [#allocation2], %s207
        %p209 = pneg %p42
        %p210 = pneg %p39
        %p211 = pneg %p63
        %p212 = pneg %p60
        %p213 = pneg %p84
        %p214 = pneg %p81
        %p215 = pneg %p110
        %p216 = pneg %p107
        %s217 = sand.u32 %s97, 1
        %s218 = scalar_lea.sflag [#allocation4], %s217
        %s219 = sand.u32 %s97, 1
        %s220 = smul.addr %s219, 32
        %s221 = scalar_lea.vmem [#allocation8], %s220
        %s222 = smul.u32 2, %s21
        %s223 = smul.u32 2, %s21
        %v225 = vld [vmem:[%s188] sm:$0xf]
        %v226 = vld [vmem:[%s188 + $0x4] sm:$0xf]
        %v227 = vld [vmem:[#allocation5] sm:$0xff]
        %v228 = vld [vmem:[#allocation5 + $0x8] sm:$0xff]
        %v229 = vld [vmem:[#allocation5 + $0x10] sm:$0xff]
        %v230 = vld [vmem:[#allocation5 + $0x18] sm:$0xff]
        %v231 = vld [vmem:[#allocation7] sm:$0x3]
        %v233 = vperm.slane %v231, 0
        %v234 = vperm.slane %v231, 1
        %v239 = vunpack.c.l.b16 %v225
        %v240 = vunpack.c.l.b16 %v226
        %v241 = vpack.c.b16 %v240, %v239
        %v246 = vunpack.c.l.b16 %v227
        %v247 = vunpack.c.h.b16 %v227
        %v248 = vunpack.c.l.b16 %v228
        %v249 = vunpack.c.h.b16 %v228
        %v250 = vunpack.c.l.b16 %v229
        %v251 = vunpack.c.h.b16 %v229
        %v252 = vunpack.c.l.b16 %v230
        %v253 = vunpack.c.h.b16 %v230
        %v254 = vpack.c.b16 %v248, %v246
        %v255 = vpack.c.b16 %v249, %v247
        %v256 = vpack.c.b16 %v252, %v250
        %v257 = vpack.c.b16 %v253, %v251
        %vm262 = vcmask 261120
        %v264 = vsel %vm262, %v241, 0
        %266 = vmatpush.bf16.msra.mxu0 0
        %267 = vmatpush.bf16.msra.mxu0 0
        %268 = vmatpush.bf16.msra.mxu0 0
        %269 = vmatpush.bf16.msra.mxu0 0
        %270 = vmatpush.bf16.msra.mxu0 0
        %271 = vmatpush.bf16.msra.mxu0 0
        %272 = vmatpush.bf16.msra.mxu0 %v256
        %273 = vmatpush.bf16.msra.mxu0 %v254
        %274 = vmatmul.bf16.gmra.mxu0 %v264
        %v275 = vpop.f32.mrf.mxu0
        %v276 = vadd.f32 %v233, %v275
        %v277 = vpop.f32.mrf.mxu0
        %v278 = vadd.f32 %v233, %v277
        %279 = vdwg.mxu0
        %280 = vmatpush.bf16.msra.mxu0 0
        %281 = vmatpush.bf16.msra.mxu0 0
        %282 = vmatpush.bf16.msra.mxu0 0
        %283 = vmatpush.bf16.msra.mxu0 0
        %284 = vmatpush.bf16.msra.mxu0 0
        %285 = vmatpush.bf16.msra.mxu0 0
        %286 = vmatpush.bf16.msra.mxu0 %v257
        %287 = vmatpush.bf16.msra.mxu0 %v255
        %288 = vmatmul.bf16.gmra.mxu0 %v264
        %v289 = vpop.f32.mrf.mxu0
        %v290 = vadd.f32 %v234, %v289
        %v291 = vpop.f32.mrf.mxu0
        %v292 = vadd.f32 %v234, %v291
        %293 = vdwg.mxu0
        %v294 = vmax.f32 %v276, %v290
        %295 = vmax.xlane.f32.xlu0 %v294
        %v296 = vpop.xlane.xlu0 %295
        %v297 = vmax.f32 %v278, %v292
        %298 = vmax.xlane.f32.xlu0 %v297
        %v299 = vpop.xlane.xlu0 %298
        %v300 = vsub.f32 %v276, %v296
        %v301 = vsub.f32 %v290, %v296
        %v302 = vsub.f32 %v278, %v299
        %v303 = vsub.f32 %v292, %v299
        %v304 = vmul.f32 %v300, 1.442695
        %v305 = vpow.pop %v304
        %v306 = vmul.f32 %v301, 1.442695
        %v307 = vpow.pop %v306
        %v308 = vmul.f32 %v302, 1.442695
        %v309 = vpow.pop %v308
        %v310 = vmul.f32 %v303, 1.442695
        %v311 = vpow.pop %v310
        %v312 = vadd.f32 %v305, %v307
        %313 = vadd.xlane.f32.xlu0 %v312
        %v314 = vpop.xlane.xlu0 %313
        %v315 = vadd.f32 %v309, %v311
        %316 = vadd.xlane.f32.xlu0 %v315
        %v317 = vpop.xlane.xlu0 %316
        %v318 = vlog2.pop %v314
        %v319 = vmul.f32 %v318, 0.6931472
        %v320 = vlog2.pop %v317
        %v321 = vmul.f32 %v320, 0.6931472
        %v322 = vsub.f32 %v300, %v319
        %v323 = vsub.f32 %v301, %v319
        %v324 = vsub.f32 %v302, %v321
        %v325 = vsub.f32 %v303, %v321
        %326 = vst [vmem:[%s221] sm:$0xff] %v322
        %327 = vst [vmem:[%s221 + $0x8] sm:$0xff] %v323
        %328 = vst [vmem:[%s221 + $0x10] sm:$0xff] %v324
        %329 = vst [vmem:[%s221 + $0x18] sm:$0xff] %v325
        %s330 = sand.u32 %s97, 1
        %s331 = scalar_lea.sflag [#allocation4], %s330
        %s332 = sand.u32 %s97, 1
        %s333 = smul.addr %s332, 32
        %s334 = scalar_lea.vmem [#allocation8], %s333
        // Predicated region
        $region45: #{tpu_custom_call.1} parent=31 // pred_check
          %p335 = pneg %p107
        $region46: #{tpu_custom_call.1} parent=31 // pred_check_branch
          %337 = sbr.rel (%p335) target = $region48
        $region47: #{tpu_custom_call.1} parent=31 // pred_region
          %s338 = smul.u32 2, %s21
          %340 = vsyncadd %s331, 0
          %s341 = smul.addr %s338, 2
          %s342 = smul.addr %s341, 8
          %s343 = scalar_lea.hbm %s3, %s342
          %s344 = sshll.u32 %s334, 4
          %s345 = int_to_ptr.vmem [resolvable:$true] %s344
          %s346 = sshll.u32 %s343, 4
          %s347 = int_to_ptr.hbm [resolvable:$true] %s346
          %352 = dma.vmem_to_hbm [thread:$0]  %s345, 512, %s347, %s331, 256, 256, 16
        $region48: #{tpu_custom_call.1} parent=31 // pred_fallthru
          _
      $region32: #{tpu_custom_call.1} parent=5 // pred_fallthru
        _
      %p353 = scmp.le.s32.totalorder 2, %s16
      // Predicated region
      $region49: #{tpu_custom_call.1} parent=5 // pred_check
        %p354 = pneg %p353
      $region50: #{tpu_custom_call.1} parent=5 // pred_check_branch
        %356 = sbr.rel (%p354) target = $region52
      $region51: #{tpu_custom_call.1} parent=5 // pred_region
        %s357 = ssub.s32 %s16, 2
        // Predicated region
        $region53: #{tpu_custom_call.1} parent=51 // pred_check
          %p358 = pneg %p113
        $region54: #{tpu_custom_call.1} parent=51 // pred_check_branch
          %360 = sbr.rel (%p358) target = $region56
        $region55: #{tpu_custom_call.1} parent=51 // pred_region
          %s361 = sand.u32 %s98, 1
          %s362 = scalar_lea.sflag [#allocation4], %s361
          %s363 = sand.u32 %s98, 1
          %s364 = smul.addr %s363, 32
          %s365 = scalar_lea.vmem [#allocation8], %s364
          %367 = dma.done %s362, 512
        $region56: #{tpu_custom_call.1} parent=51 // pred_fallthru
          _
      $region52: #{tpu_custom_call.1} parent=5 // pred_fallthru
        _
    $region6: #{tpu_custom_call.1} parent=1 // loop_footer
      %s20 = sadd.s32 1, %s16
    $region7: #{tpu_custom_call.1} parent=1 // loop_footer_branch
      %15 = sbr.rel target = $region3
    $region8: #{tpu_custom_call.1} parent=1 // loop_exit
      _
    %368 = vsyncpa [#allocation3], 1
    %s369 = scalar_lea.sflag [#allocation3], 1
    %370 = vsyncpa %s369, 1
    %371 = vsyncpa [#allocation6], 1
    %372 = vsyncpa [#allocation4], 1
    %s373 = scalar_lea.sflag [#allocation4], 1
    %374 = vsyncpa %s373, 1

// kernel: tpu_custom_call.1
$region0: #{tpu_custom_call.1}
  #allocation0 [shape = 'u32[]', space=smem, size = 0x4, offset = 0x4, fixed_abs, tag = 'smem constant byte address 0x4 - core index']
  #allocation1 [shape = 'u32[72,128]{1,0:T(1,128)}', space=vmem, size = 0x9000, scoped, tag = 'internal scratch']
  %s0 = inlined_call_operand.hbm [shape: bf16[32,32], index: 0, kind: input, shape index: {}]
  %s1 = inlined_call_operand.hbm [shape: bf16[32,256], index: 1, kind: input, shape index: {}]
  %s2 = inlined_call_operand.hbm [shape: f32[1,256], index: 2, kind: input, shape index: {}]
  %s3 = inlined_call_operand.hbm [shape: f32[32,256], index: 3, kind: output, shape index: {}]
  %s4 = sld [smem:[#allocation0]]
  $region57: #{tpu_custom_call.1} parent=0
    _
  %s6 = ssub.s32 1, %s4
  %s7 = scalar_select 0, %s6, %s4
  $region1: #{tpu_custom_call.1} parent=0
    #allocation2 [shape = 'u8[8192]{0}', space=vmem, size = 0x2000, scoped, tag = 'input window, operand 0']
    #allocation3 [shape = 's32[2]{0}', space=sflag, size = 0x8, scoped, tag = 'scoped memory for tpu_custom_call.1']
    #allocation4 [shape = 's32[2]{0}', space=sflag, size = 0x8, scoped, tag = 'scoped memory for tpu_custom_call.1']
    #allocation5 [shape = 'u8[16384]{0}', space=vmem, size = 0x4000, scoped, tag = 'input window, operand 1, single buffered']
    #allocation6 [shape = 's32[1]{0}', space=sflag, size = 0x4, scoped, tag = 'scoped memory for tpu_custom_call.1']
    #allocation7 [shape = 'u8[1024]{0}', space=vmem, size = 0x400, scoped, tag = 'input window, operand 2, single buffered']
    #allocation8 [shape = 'u8[32768]{0}', space=vmem, size = 0x8000, scoped, tag = 'output window, operand 0']
    %8 = vsyncpa [#allocation3], 0
    %s9 = scalar_lea.sflag [#allocation3], 1
    %10 = vsyncpa %s9, 0
    %11 = vsyncpa [#allocation6], 0
    %12 = vsyncpa [#allocation4], 0
    %s13 = scalar_lea.sflag [#allocation4], 1
    %14 = vsyncpa %s13, 0
    loop: start=0, step=1, limit=4
    $region2: #{tpu_custom_call.1} parent=1 // loop_pre_header
      _
    $region3: #{tpu_custom_call.1} parent=1 // loop_header
      %s16 = sphi 0, %s20
      %p17 = scmp.ge.s32.totalorder %s16, 4
      %s26 = sphi 0, %s28
      %s29 = sphi 0, %s26
      %s30 = sphi 0, %s29
      %s46 = sphi 0, %s30
      %s50 = sphi 0, %s50
      %s52 = sphi 0, %s50
      %s53 = sphi 0, %s52
      %s67 = sphi 0, %s53
      %s71 = sphi 0, %s71
      %s73 = sphi 0, %s71
      %s74 = sphi 0, %s73
      %s88 = sphi 0, %s74
      %s94 = sphi 0, %s96
      %s97 = sphi 0, %s94
      %s98 = sphi 0, %s97
      %s114 = sphi 0, %s98
    $region4: #{tpu_custom_call.1} parent=1 // loop_header_branch
      %19 = sbr.rel (%p17) target = $region8
    $region5: #{tpu_custom_call.1} parent=1 // loop_body
      %s21 = ssub.s32 %s16, 1
      %s22 = ssub.s32 %s16, 2
      %s23 = sadd.s32 %s16, 1
      %s24 = ssub.s32 %s16, %s23
      %p25 = scmp.eq.s32.totalorder %s24, 0
      %s27 = sadd.s32 %s26, 1
      %s28 = scalar_select %p25, %s26, %s27
      %p31 = pneg %p25
      %p32 = scmp.eq.s32.totalorder %s16, 1
      %p33 = por %p31, %p32
      %p34 = scmp.ne.s32.totalorder %s26, %s29
      %p35 = scmp.eq.s32.totalorder %s16, 0
      %p36 = por %p34, %p35
      %p37 = scmp.ne.s32.totalorder %s26, %s29
      %p38 = scmp.eq.s32.totalorder %s21, 1
      %p39 = por %p37, %p38
      %p40 = scmp.ne.s32.totalorder %s29, %s30
      %p41 = scmp.eq.s32.totalorder %s21, 0
      %p42 = por %p40, %p41
      %p43 = scmp.ne.s32.totalorder %s29, %s30
      %p44 = scmp.eq.s32.totalorder %s22, 1
      %p45 = por %p43, %p44
      %p47 = scmp.ne.s32.totalorder %s30, %s46
      %p48 = scmp.eq.s32.totalorder %s22, 0
      %p49 = por %p47, %p48
      %s51 = sadd.s32 %s50, 1
      %p54 = scmp.eq.s32.totalorder %s16, 1
      %p55 = scmp.ne.s32.totalorder %s50, %s52
      %p56 = scmp.eq.s32.totalorder %s16, 0
      %p57 = por %p55, %p56
      %p58 = scmp.ne.s32.totalorder %s50, %s52
      %p59 = scmp.eq.s32.totalorder %s21, 1
      %p60 = por %p58, %p59
      %p61 = scmp.ne.s32.totalorder %s52, %s53
      %p62 = scmp.eq.s32.totalorder %s21, 0
      %p63 = por %p61, %p62
      %p64 = scmp.ne.s32.totalorder %s52, %s53
      %p65 = scmp.eq.s32.totalorder %s22, 1
      %p66 = por %p64, %p65
      %p68 = scmp.ne.s32.totalorder %s53, %s67
      %p69 = scmp.eq.s32.totalorder %s22, 0
      %p70 = por %p68, %p69
      %s72 = sadd.s32 %s71, 1
      %p75 = scmp.eq.s32.totalorder %s16, 1
      %p76 = scmp.ne.s32.totalorder %s71, %s73
      %p77 = scmp.eq.s32.totalorder %s16, 0
      %p78 = por %p76, %p77
      %p79 = scmp.ne.s32.totalorder %s71, %s73
      %p80 = scmp.eq.s32.totalorder %s21, 1
      %p81 = por %p79, %p80
      %p82 = scmp.ne.s32.totalorder %s73, %s74
      %p83 = scmp.eq.s32.totalorder %s21, 0
      %p84 = por %p82, %p83
      %p85 = scmp.ne.s32.totalorder %s73, %s74
      %p86 = scmp.eq.s32.totalorder %s22, 1
      %p87 = por %p85, %p86
      %p89 = scmp.ne.s32.totalorder %s74, %s88
      %p90 = scmp.eq.s32.totalorder %s22, 0
      %p91 = por %p89, %p90
      %s92 = ssub.s32 %s16, %s23
      %p93 = scmp.eq.s32.totalorder %s92, 0
      %s95 = sadd.s32 %s94, 1
      %s96 = scalar_select %p93, %s94, %s95
      %p99 = pneg %p93
      %p100 = scmp.eq.s32.totalorder %s16, 1
      %p101 = por %p99, %p100
      %p102 = scmp.ne.s32.totalorder %s94, %s97
      %p103 = scmp.eq.s32.totalorder %s16, 0
      %p104 = por %p102, %p103
      %p105 = scmp.ne.s32.totalorder %s94, %s97
      %p106 = scmp.eq.s32.totalorder %s21, 1
      %p107 = por %p105, %p106
      %p108 = scmp.ne.s32.totalorder %s97, %s98
      %p109 = scmp.eq.s32.totalorder %s21, 0
      %p110 = por %p108, %p109
      %p111 = scmp.ne.s32.totalorder %s97, %s98
      %p112 = scmp.eq.s32.totalorder %s22, 1
      %p113 = por %p111, %p112
      %p115 = scmp.ne.s32.totalorder %s98, %s114
      %p116 = scmp.eq.s32.totalorder %s22, 0
      %p117 = por %p115, %p116
      %p118 = scmp.le.s32.totalorder 1, %s16
      %p119 = scmp.lt.s32.totalorder %s16, 3
      %p120 = pnand %p118, %p119
      %p121 = pneg %p120
      // Predicated region
      $region9: #{tpu_custom_call.1} parent=5 // pred_check
        _
      $region10: #{tpu_custom_call.1} parent=5 // pred_check_branch
        %123 = sbr.rel (%p120) target = $region12
      $region11: #{tpu_custom_call.1} parent=5 // pred_region
        %s124 = ssub.s32 %s16, 1
        // Predicated region
        $region13: #{tpu_custom_call.1} parent=11 // pred_check
          %p125 = pneg %p63
        $region14: #{tpu_custom_call.1} parent=11 // pred_check_branch
          %127 = sbr.rel (%p125) target = $region16
        $region15: #{tpu_custom_call.1} parent=11 // pred_region
          %129 = vsyncadd [#allocation6], 0
          %s130 = sshll.u32 %s1, 4
          %s131 = int_to_ptr.hbm [resolvable:$true] %s130
          %s132 = sshll.u32 [#allocation5], 4
          %s133 = int_to_ptr.vmem [resolvable:$true] %s132
          %138 = dma.hbm_to_vmem [thread:$0]  %s131, 512, %s133, [#allocation6], 128, 128, 8
        $region16: #{tpu_custom_call.1} parent=11 // pred_fallthru
          _
        // Predicated region
        $region17: #{tpu_custom_call.1} parent=11 // pred_check
          %p139 = pneg %p84
        $region18: #{tpu_custom_call.1} parent=11 // pred_check_branch
          %141 = sbr.rel (%p139) target = $region20
        $region19: #{tpu_custom_call.1} parent=11 // pred_region
          %143 = vsyncadd [#allocation6], 0
          %s145 = sshll.u32 %s2, 4
          %s146 = int_to_ptr.hbm [resolvable:$true] %s145
          %s147 = sshll.u32 [#allocation7], 4
          %s148 = int_to_ptr.vmem [resolvable:$true] %s147
          %150 = dma.hbm_to_vmem [thread:$0]  %s146, 32, %s148, [#allocation6]
        $region20: #{tpu_custom_call.1} parent=11 // pred_fallthru
          _
      $region12: #{tpu_custom_call.1} parent=5 // pred_fallthru
        _
      %p151 = scmp.lt.s32.totalorder %s16, 2
      // Predicated region
      $region21: #{tpu_custom_call.1} parent=5 // pred_check
        %p152 = pneg %p151
      $region22: #{tpu_custom_call.1} parent=5 // pred_check_branch
        %154 = sbr.rel (%p152) target = $region24
      $region23: #{tpu_custom_call.1} parent=5 // pred_region
        // Predicated region
        $region25: #{tpu_custom_call.1} parent=23 // pred_check
          %p155 = pneg %p36
        $region26: #{tpu_custom_call.1} parent=23 // pred_check_branch
          %157 = sbr.rel (%p155) target = $region28
        $region27: #{tpu_custom_call.1} parent=23 // pred_region
          %s158 = sand.u32 %s26, 1
          %s159 = scalar_lea.sflag [#allocation3], %s158
          %s160 = sand.u32 %s26, 1
          %s161 = smul.addr %s160, 8
          %s162 = scalar_lea.vmem [#allocation2], %s161
          %s163 = smul.u32 2, %s16
          %165 = vsyncadd %s159, 0
          %s166 = smul.addr %s163, 4
          %s167 = scalar_lea.hbm %s0, %s166
          %s168 = sshll.u32 %s167, 4
          %s169 = int_to_ptr.hbm [resolvable:$true] %s168
          %s170 = sshll.u32 %s162, 4
          %s171 = int_to_ptr.vmem [resolvable:$true] %s170
          %176 = dma.hbm_to_vmem [thread:$0]  %s169, 128, %s171, %s159, 64, 64, 4
        $region28: #{tpu_custom_call.1} parent=23 // pred_fallthru
          _
      $region24: #{tpu_custom_call.1} parent=5 // pred_fallthru
        _
      %p177 = scmp.le.s32.totalorder 1, %s16
      %p178 = scmp.lt.s32.totalorder %s16, 3
      %p179 = pnand %p177, %p178
      %p180 = pneg %p179
      // Predicated region
      $region29: #{tpu_custom_call.1} parent=5 // pred_check
        _
      $region30: #{tpu_custom_call.1} parent=5 // pred_check_branch
        %182 = sbr.rel (%p179) target = $region32
      $region31: #{tpu_custom_call.1} parent=5 // pred_region
        %s183 = ssub.s32 %s16, 1
        %s184 = sand.u32 %s29, 1
        %s185 = scalar_lea.sflag [#allocation3], %s184
        %s186 = sand.u32 %s29, 1
        %s187 = smul.addr %s186, 8
        %s188 = scalar_lea.vmem [#allocation2], %s187
        // Predicated region
        $region33: #{tpu_custom_call.1} parent=31 // pred_check
          %p189 = pneg %p42
        $region34: #{tpu_custom_call.1} parent=31 // pred_check_branch
          %191 = sbr.rel (%p189) target = $region36
        $region35: #{tpu_custom_call.1} parent=31 // pred_region
          %193 = dma.done %s185, 128
        $region36: #{tpu_custom_call.1} parent=31 // pred_fallthru
          _
        // Predicated region
        $region37: #{tpu_custom_call.1} parent=31 // pred_check
          %p194 = pneg %p63
        $region38: #{tpu_custom_call.1} parent=31 // pred_check_branch
          %196 = sbr.rel (%p194) target = $region40
        $region39: #{tpu_custom_call.1} parent=31 // pred_region
          %198 = dma.done [#allocation6], 512
        $region40: #{tpu_custom_call.1} parent=31 // pred_fallthru
          _
        // Predicated region
        $region41: #{tpu_custom_call.1} parent=31 // pred_check
          %p199 = pneg %p84
        $region42: #{tpu_custom_call.1} parent=31 // pred_check_branch
          %201 = sbr.rel (%p199) target = $region44
        $region43: #{tpu_custom_call.1} parent=31 // pred_region
          %203 = dma.done [#allocation6], 32
        $region44: #{tpu_custom_call.1} parent=31 // pred_fallthru
          _
        %s204 = sand.u32 %s29, 1
        %s205 = scalar_lea.sflag [#allocation3], %s204
        %s206 = sand.u32 %s29, 1
        %s207 = smul.addr %s206, 8
        %s208 = scalar_lea.vmem [#allocation2], %s207
        %p209 = pneg %p42
        %p210 = pneg %p39
        %p211 = pneg %p63
        %p212 = pneg %p60
        %p213 = pneg %p84
        %p214 = pneg %p81
        %p215 = pneg %p110
        %p216 = pneg %p107
        %s217 = sand.u32 %s97, 1
        %s218 = scalar_lea.sflag [#allocation4], %s217
        %s219 = sand.u32 %s97, 1
        %s220 = smul.addr %s219, 32
        %s221 = scalar_lea.vmem [#allocation8], %s220
        %s222 = smul.u32 2, %s21
        %s223 = smul.u32 2, %s21
        %v225 = vld [vmem:[%s188] sm:$0xf]
        %v226 = vld [vmem:[%s188 + $0x4] sm:$0xf]
        %v227 = vld [vmem:[#allocation5] sm:$0xff]
        %v228 = vld [vmem:[#allocation5 + $0x8] sm:$0xff]
        %v229 = vld [vmem:[#allocation5 + $0x10] sm:$0xff]
        %v230 = vld [vmem:[#allocation5 + $0x18] sm:$0xff]
        %v231 = vld [vmem:[#allocation7] sm:$0x3]
        %v233 = vperm.slane %v231, 0
        %v234 = vperm.slane %v231, 1
        %v239 = vunpack.c.l.b16 %v225
        %v240 = vunpack.c.l.b16 %v226
        %v241 = vpack.c.b16 %v240, %v239
        %v246 = vunpack.c.l.b16 %v227
        %v247 = vunpack.c.h.b16 %v227
        %v248 = vunpack.c.l.b16 %v228
        %v249 = vunpack.c.h.b16 %v228
        %v250 = vunpack.c.l.b16 %v229
        %v251 = vunpack.c.h.b16 %v229
        %v252 = vunpack.c.l.b16 %v230
        %v253 = vunpack.c.h.b16 %v230
        %v254 = vpack.c.b16 %v248, %v246
        %v255 = vpack.c.b16 %v249, %v247
        %v256 = vpack.c.b16 %v252, %v250
        %v257 = vpack.c.b16 %v253, %v251
        %vm262 = vcmask 261120
        %v264 = vsel %vm262, %v241, 0
        %266 = vmatpush.bf16.msra.mxu0 0
        %267 = vmatpush.bf16.msra.mxu0 0
        %268 = vmatpush.bf16.msra.mxu0 0
        %269 = vmatpush.bf16.msra.mxu0 0
        %270 = vmatpush.bf16.msra.mxu0 0
        %271 = vmatpush.bf16.msra.mxu0 0
        %272 = vmatpush.bf16.msra.mxu0 %v256
        %273 = vmatpush.bf16.msra.mxu0 %v254
        %274 = vmatmul.bf16.gmra.mxu0 %v264
        %v275 = vpop.f32.mrf.mxu0
        %v276 = vadd.f32 %v233, %v275
        %v277 = vpop.f32.mrf.mxu0
        %v278 = vadd.f32 %v233, %v277
        %279 = vdwg.mxu0
        %280 = vmatpush.bf16.msra.mxu0 0
        %281 = vmatpush.bf16.msra.mxu0 0
        %282 = vmatpush.bf16.msra.mxu0 0
        %283 = vmatpush.bf16.msra.mxu0 0
        %284 = vmatpush.bf16.msra.mxu0 0
        %285 = vmatpush.bf16.msra.mxu0 0
        %286 = vmatpush.bf16.msra.mxu0 %v257
        %287 = vmatpush.bf16.msra.mxu0 %v255
        %288 = vmatmul.bf16.gmra.mxu0 %v264
        %v289 = vpop.f32.mrf.mxu0
        %v290 = vadd.f32 %v234, %v289
        %v291 = vpop.f32.mrf.mxu0
        %v292 = vadd.f32 %v234, %v291
        %293 = vdwg.mxu0
        %v294 = vmax.f32 %v276, %v290
        %295 = vmax.xlane.f32.xlu0 %v294
        %v296 = vpop.xlane.xlu0 %295
        %v297 = vmax.f32 %v278, %v292
        %298 = vmax.xlane.f32.xlu0 %v297
        %v299 = vpop.xlane.xlu0 %298
        %v300 = vsub.f32 %v276, %v296
        %v301 = vsub.f32 %v290, %v296
        %v302 = vsub.f32 %v278, %v299
        %v303 = vsub.f32 %v292, %v299
        %v304 = vmul.f32 %v300, 1.442695
        %v305 = vpow.pop %v304
        %v306 = vmul.f32 %v301, 1.442695
        %v307 = vpow.pop %v306
        %v308 = vmul.f32 %v302, 1.442695
        %v309 = vpow.pop %v308
        %v310 = vmul.f32 %v303, 1.442695
        %v311 = vpow.pop %v310
        %v312 = vadd.f32 %v305, %v307
        %313 = vadd.xlane.f32.xlu0 %v312
        %v314 = vpop.xlane.xlu0 %313
        %v315 = vadd.f32 %v309, %v311
        %316 = vadd.xlane.f32.xlu0 %v315
        %v317 = vpop.xlane.xlu0 %316
        %v318 = vlog2.pop %v314
        %v319 = vmul.f32 %v318, 0.6931472
        %v320 = vlog2.pop %v317
        %v321 = vmul.f32 %v320, 0.6931472
        %v322 = vsub.f32 %v300, %v319
        %v323 = vsub.f32 %v301, %v319
        %v324 = vsub.f32 %v302, %v321
        %v325 = vsub.f32 %v303, %v321
        %326 = vst [vmem:[%s221] sm:$0xff] %v322
        %327 = vst [vmem:[%s221 + $0x8] sm:$0xff] %v323
        %328 = vst [vmem:[%s221 + $0x10] sm:$0xff] %v324
        %329 = vst [vmem:[%s221 + $0x18] sm:$0xff] %v325
        %s330 = sand.u32 %s97, 1
        %s331 = scalar_lea.sflag [#allocation4], %s330
        %s332 = sand.u32 %s97, 1
        %s333 = smul.addr %s332, 32
        %s334 = scalar_lea.vmem [#allocation8], %s333
        // Predicated region
        $region45: #{tpu_custom_call.1} parent=31 // pred_check
          %p335 = pneg %p107
        $region46: #{tpu_custom_call.1} parent=31 // pred_check_branch
          %337 = sbr.rel (%p335) target = $region48
        $region47: #{tpu_custom_call.1} parent=31 // pred_region
          %s338 = smul.u32 2, %s21
          %340 = vsyncadd %s331, 0
          %s341 = smul.addr %s338, 2
          %s342 = smul.addr %s341, 8
          %s343 = scalar_lea.hbm %s3, %s342
          %s344 = sshll.u32 %s334, 4
          %s345 = int_to_ptr.vmem [resolvable:$true] %s344
          %s346 = sshll.u32 %s343, 4
          %s347 = int_to_ptr.hbm [resolvable:$true] %s346
          %352 = dma.vmem_to_hbm [thread:$0]  %s345, 512, %s347, %s331, 256, 256, 16
        $region48: #{tpu_custom_call.1} parent=31 // pred_fallthru
          _
      $region32: #{tpu_custom_call.1} parent=5 // pred_fallthru
        _
      %p353 = scmp.le.s32.totalorder 2, %s16
      // Predicated region
      $region49: #{tpu_custom_call.1} parent=5 // pred_check
        %p354 = pneg %p353
      $region50: #{tpu_custom_call.1} parent=5 // pred_check_branch
        %356 = sbr.rel (%p354) target = $region52
      $region51: #{tpu_custom_call.1} parent=5 // pred_region
        %s357 = ssub.s32 %s16, 2
        // Predicated region
        $region53: #{tpu_custom_call.1} parent=51 // pred_check
          %p358 = pneg %p113
        $region54: #{tpu_custom_call.1} parent=51 // pred_check_branch
          %360 = sbr.rel (%p358) target = $region56
        $region55: #{tpu_custom_call.1} parent=51 // pred_region
          %s361 = sand.u32 %s98, 1
          %s362 = scalar_lea.sflag [#allocation4], %s361
          %s363 = sand.u32 %s98, 1
          %s364 = smul.addr %s363, 32
          %s365 = scalar_lea.vmem [#allocation8], %s364
          %367 = dma.done %s362, 512
        $region56: #{tpu_custom_call.1} parent=51 // pred_fallthru
          _
      $region52: #{tpu_custom_call.1} parent=5 // pred_fallthru
        _
    $region6: #{tpu_custom_call.1} parent=1 // loop_footer
      %s20 = sadd.s32 1, %s16
    $region7: #{tpu_custom_call.1} parent=1 // loop_footer_branch
      %15 = sbr.rel target = $region3
    $region8: #{tpu_custom_call.1} parent=1 // loop_exit
      _
    %368 = vsyncpa [#allocation3], 1
    %s369 = scalar_lea.sflag [#allocation3], 1
    %370 = vsyncpa %s369, 1
    %371 = vsyncpa [#allocation6], 1
    %372 = vsyncpa [#allocation4], 1
    %s373 = scalar_lea.sflag [#allocation4], 1
    %374 = vsyncpa %s373, 1

</llo_original>
